<compile_context>
chip_gen: v6e
topology: v6e:2x2x1
jax: 0.10.0
libtpu: 0.0.40
codegen_flags: <defaults>
</compile_context>

<pallas_src>
import functools

import jax
import jax.numpy as jnp
from jax.experimental import pallas as pl
from jax.experimental.pallas import tpu as pltpu

_LANE = 128
_SUBLANE = 8
_ALIGN = _SUBLANE * _LANE          # 1024-element slab granularity (zero-copy path)
_TILE_ROWS_MAX = 2048              # 2048 x 128 f32 = 1 MiB per input block
_VMEM_LIMIT = 32 * 1024 * 1024


def _round_up(x, m):
    return ((x + m - 1) // m) * m


def _rmse_sum_kernel(pred_ref, true_ref, acc_ref, *, eps, tile_rows, last_step,
                     valid_last):
    """Accumulate sum(sqrt((p - t)^2 + eps)) into a resident (8,128) f32 block."""
    i = pl.program_id(0)

    @pl.when(i == 0)
    def _init():
        acc_ref[...] = jnp.zeros_like(acc_ref)

    def accumulate(pred, true, nrows):
        d = pred.astype(jnp.float32) - true.astype(jnp.float32)
        v = jnp.sqrt(d * d + jnp.float32(eps))                       # EUP sqrt
        # Fold (nrows,128) -> (8,128): pure elementwise vreg adds, no XLU.
        acc_ref[...] += jnp.sum(
            v.reshape(nrows // _SUBLANE, _SUBLANE, _LANE), axis=0)

    if valid_last == tile_rows:
        # Tile size divides the slab: identical mask-free path every step.
        accumulate(pred_ref[...], true_ref[...], tile_rows)
    else:
        # Only the final block is partial; keep the steady state mask-free.
        @pl.when(i != last_step)
        def _body():
            accumulate(pred_ref[...], true_ref[...], tile_rows)

        @pl.when(i == last_step)
        def _tail():
            accumulate(pred_ref[:valid_last, :], true_ref[:valid_last, :],
                       valid_last)


def _rmse_elem_kernel(pred_ref, true_ref, out_ref, *, eps):
    """Elementwise sqrt((p - t)^2 + eps) for reduction='none'."""
    d = pred_ref[...].astype(jnp.float32) - true_ref[...].astype(jnp.float32)
    out_ref[...] = jnp.sqrt(d * d + jnp.float32(eps)).astype(out_ref.dtype)


def rmse_loss(y_pred, y_true, *, eps=1e-9, reduction='mean'):
    """RMSELoss forward: mean/sum/none of sqrt((y_pred - y_true)**2 + eps)."""
    assert y_pred.shape == y_true.shape, (y_pred.shape, y_true.shape)
    if reduction not in ('mean', 'sum', 'none'):
        raise ValueError(f"unknown reduction: {reduction!r}")

    if not jnp.issubdtype(y_pred.dtype, jnp.floating):
        y_pred = y_pred.astype(jnp.float32)
    if not jnp.issubdtype(y_true.dtype, jnp.floating):
        y_true = y_true.astype(jnp.float32)
    out_dtype = jnp.result_type(y_pred.dtype, y_true.dtype)
    orig_shape = y_pred.shape

    n_elems = y_pred.size
    n_padded = _round_up(n_elems, _ALIGN)
    n_pad = n_padded - n_elems
    rows = n_padded // _LANE                        # multiple of 8 by construction

    def to_slab(x):
        flat = x.reshape(-1)                        # zero-copy
        if n_pad:
            # One copy only for shapes not divisible by 1024 elements; the
            # sqrt(eps) contributed by the zero padding is subtracted
            # analytically below (no in-kernel mask anywhere).
            flat = jnp.pad(flat, (0, n_pad))
        return flat.reshape(rows, _LANE)            # zero-copy when n_pad == 0

    pred2d = to_slab(y_pred)                        # keep upstream dtype (bf16 ok)
    true2d = to_slab(y_true)

    tile_rows = min(_TILE_ROWS_MAX, rows)           # multiple of 8; of 32 when large
    nsteps = -(-rows // tile_rows)
    valid_last = rows - (nsteps - 1) * tile_rows    # multiple of 8, in (0, tile_rows]

    in_specs = [
        pl.BlockSpec((tile_rows, _LANE), lambda i: (i, 0)),
        pl.BlockSpec((tile_rows, _LANE), lambda i: (i, 0)),
    ]

    if reduction == 'none':
        out2d = pl.pallas_call(
            functools.partial(_rmse_elem_kernel, eps=eps),
            out_shape=jax.ShapeDtypeStruct((rows, _LANE), out_dtype),
            grid_spec=pltpu.PrefetchScalarGridSpec(
                num_scalar_prefetch=0,
                grid=(nsteps,),
                in_specs=in_specs,
                out_specs=pl.BlockSpec((tile_rows, _LANE), lambda i: (i, 0)),
            ),
            compiler_params=pltpu.CompilerParams(
                dimension_semantics=("parallel",),
                vmem_limit_bytes=_VMEM_LIMIT),
        )(pred2d, true2d)
        flat = out2d.reshape(-1)
        if n_pad:
            flat = flat[:n_elems]
        return flat.reshape(orig_shape)

    kernel = functools.partial(
        _rmse_sum_kernel, eps=eps, tile_rows=tile_rows,
        last_step=nsteps - 1, valid_last=valid_last)

    bytes_accessed = (n_padded * (y_pred.dtype.itemsize + y_true.dtype.itemsize)
                      + _SUBLANE * _LANE * 4)

    partials = pl.pallas_call(
        kernel,
        out_shape=jax.ShapeDtypeStruct((_SUBLANE, _LANE), jnp.float32),
        grid_spec=pltpu.PrefetchScalarGridSpec(
            num_scalar_prefetch=0,
            grid=(nsteps,),
            in_specs=in_specs,
            # Resident accumulator: same (8,128) block across the whole grid.
            out_specs=pl.BlockSpec((_SUBLANE, _LANE), lambda i: (0, 0)),
        ),
        compiler_params=pltpu.CompilerParams(
            dimension_semantics=("arbitrary",),
            vmem_limit_bytes=_VMEM_LIMIT),
        cost_estimate=pl.CostEstimate(
            flops=4 * n_padded,
            transcendentals=n_padded,
            bytes_accessed=bytes_accessed),
    )(pred2d, true2d)

    total = jnp.sum(partials)
    if n_pad:
        # Each zero-padded element contributed exactly sqrt(eps); remove them.
        total = total - jnp.float32(n_pad) * jnp.sqrt(jnp.float32(eps))

    if reduction == 'sum':
        return total.astype(out_dtype)
    return (total / jnp.float32(n_elems)).astype(out_dtype)      # 'mean'


def _rmse_ref(y_pred, y_true, eps=1e-9):
    d = y_pred.astype(jnp.float32) - y_true.astype(jnp.float32)
    return jnp.mean(jnp.sqrt(d * d + jnp.float32(eps)))


if __name__ == "__main__":
    key = jax.random.PRNGKey(0)
    k1, k2 = jax.random.split(key)

    # NCHW-style regression maps, like the PyTorch module would typically see.
    shape = (2, 4, 16, 16)
    y_pred = jax.random.normal(k1, shape, dtype=jnp.float32)
    y_true = jax.random.normal(k2, shape, dtype=jnp.float32)

    mean_fn = jax.jit(rmse_loss)

    # reduction='mean' (default), aligned zero-copy path.
    loss = jax.block_until_ready(mean_fn(y_pred, y_true))
    ref = _rmse_ref(y_pred, y_true)
    assert jnp.allclose(loss, ref, rtol=1e-4, atol=1e-6), (loss, ref)

    # reduction='sum'.
    loss_sum = jax.block_until_ready(
        jax.jit(lambda a, b: rmse_loss(a, b, reduction='sum'))(y_pred, y_true))
    assert jnp.allclose(loss_sum, ref * y_pred.size, rtol=1e-4), (loss_sum,)

    # reduction='none'.
    loss_none = jax.block_until_ready(
        jax.jit(lambda a, b: rmse_loss(a, b, reduction='none'))(y_pred, y_true))
    ref_none = jnp.sqrt((y_pred - y_true) ** 2 + 1e-9)
    assert loss_none.shape == shape
    assert jnp.allclose(loss_none, ref_none, rtol=1e-5, atol=1e-6)

    # Ragged shape: exercises the minimal-pad + analytic sqrt(eps) correction.
    shape2 = (3, 5, 17)
    yp2 = jax.random.normal(k1, shape2, dtype=jnp.float32)
    yt2 = jax.random.normal(k2, shape2, dtype=jnp.float32)
    loss2 = jax.block_until_ready(mean_fn(yp2, yt2))
    assert jnp.allclose(loss2, _rmse_ref(yp2, yt2), rtol=1e-4, atol=1e-6), loss2

    # Multi-step grid with a partial final tile (rows=2560 -> 2048 + 512).
    shape3 = (5, 256, 256)
    yp3 = jax.random.normal(k1, shape3, dtype=jnp.float32)
    yt3 = jax.random.normal(k2, shape3, dtype=jnp.float32)
    loss3 = jax.block_until_ready(mean_fn(yp3, yt3))
    assert jnp.allclose(loss3, _rmse_ref(yp3, yt3), rtol=1e-4, atol=1e-6), loss3

    # bf16 inputs stay bf16 in HBM (halved traffic); cast to f32 in-kernel.
    yp4 = y_pred.astype(jnp.bfloat16)
    yt4 = y_true.astype(jnp.bfloat16)
    loss4 = jax.block_until_ready(mean_fn(yp4, yt4))
    ref4 = _rmse_ref(yp4, yt4)
    assert jnp.allclose(jnp.float32(loss4), ref4, rtol=2e-2), (loss4, ref4)

    print("KERNEL_OK")
</pallas_src>

<mosaic_0001>
module attributes {stable_mosaic.version = 11 : i64} {
  func.func @_rmse_sum_kernel(%arg0: i32, %arg1: memref<16x128xf32, #tpu.memory_space<vmem>>, %arg2: memref<16x128xf32, #tpu.memory_space<vmem>>, %arg3: memref<8x128xf32, #tpu.memory_space<vmem>>) attributes {dimension_semantics = [#tpu.dimension_semantics<arbitrary>], iteration_bounds = array<i64: 1>, scalar_prefetch = 0 : i64, scratch_operands = 0 : i64, tpu.core_type = #tpu.core_type<tc>, window_params = [{transform_indices = @transform_0, window_bounds = array<i64: 16, 128>}, {transform_indices = @transform_1, window_bounds = array<i64: 16, 128>}, {pipeline_mode = #tpu.pipeline_mode<synchronous>, transform_indices = @transform_2, window_bounds = array<i64: 8, 128>}]} {
    %c0_i32 = arith.constant 0 : i32
    %0 = arith.cmpi eq, %arg0, %c0_i32 : i32
    %1 = arith.extui %0 : i1 to i32
    %c0_i32_0 = arith.constant 0 : i32
    %2 = arith.cmpi ne, %1, %c0_i32_0 : i32
    scf.if %2 {
      %cst_9 = arith.constant 0.000000e+00 : f32
      %15 = vector.broadcast %cst_9 : f32 to vector<8x128xf32>
      %c0_10 = arith.constant 0 : index
      %c0_11 = arith.constant 0 : index
      %16 = vector.load %arg3[%c0_10, %c0_11] : memref<8x128xf32, #tpu.memory_space<vmem>>, vector<8x128xf32>
      tpu.vector_store %arg3[%c0_10, %c0_11], %15 {strides = array<i32>} : memref<8x128xf32, #tpu.memory_space<vmem>>, vector<8x128xf32>,
    } else {
    }
    %c0 = arith.constant 0 : index
    %c0_1 = arith.constant 0 : index
    %3 = vector.load %arg1[%c0, %c0_1] : memref<16x128xf32, #tpu.memory_space<vmem>>, vector<16x128xf32>
    %c0_2 = arith.constant 0 : index
    %c0_3 = arith.constant 0 : index
    %4 = vector.load %arg2[%c0_2, %c0_3] : memref<16x128xf32, #tpu.memory_space<vmem>>, vector<16x128xf32>
    %5 = arith.subf %3, %4 : vector<16x128xf32>
    %6 = arith.mulf %5, %5 : vector<16x128xf32>
    %cst = arith.constant 9.99999971E-10 : f32
    %7 = vector.broadcast %cst : f32 to vector<16x128xf32>
    %8 = arith.addf %6, %7 : vector<16x128xf32>
    %9 = math.sqrt %8 : vector<16x128xf32>
    %c0_4 = arith.constant 0 : index
    %c0_5 = arith.constant 0 : index
    %10 = vector.load %arg3[%c0_4, %c0_5] : memref<8x128xf32, #tpu.memory_space<vmem>>, vector<8x128xf32>
    %11 = vector.shape_cast %9 : vector<16x128xf32> to vector<2x8x128xf32>
    %cst_6 = arith.constant dense<0.000000e+00> : vector<8x128xf32>
    %12 = vector.multi_reduction <add>, %11, %cst_6 [0] : vector<2x8x128xf32> to vector<8x128xf32>
    %13 = arith.addf %10, %12 : vector<8x128xf32>
    %c0_7 = arith.constant 0 : index
    %c0_8 = arith.constant 0 : index
    %14 = vector.load %arg3[%c0_7, %c0_8] : memref<8x128xf32, #tpu.memory_space<vmem>>, vector<8x128xf32>
    tpu.vector_store %arg3[%c0_7, %c0_8], %13 {strides = array<i32>} : memref<8x128xf32, #tpu.memory_space<vmem>>, vector<8x128xf32>,
    return
  }
  func.func @transform_0(%arg0: i32) -> (i32, i32) {
    %c0_i32 = arith.constant 0 : i32
    %c0_i32_0 = arith.constant 0 : i32
    return %arg0, %c0_i32 : i32, i32
  }
  func.func @transform_1(%arg0: i32) -> (i32, i32) {
    %c0_i32 = arith.constant 0 : i32
    %c0_i32_0 = arith.constant 0 : i32
    return %arg0, %c0_i32 : i32, i32
  }
  func.func @transform_2(%arg0: i32) -> (i32, i32) {
    %c0_i32 = arith.constant 0 : i32
    %c0_i32_0 = arith.constant 0 : i32
    %c0_i32_1 = arith.constant 0 : i32
    return %c0_i32, %c0_i32_0 : i32, i32
  }
}

</mosaic_0001>

<llo_original>
// kernel: rmse_loss.1
$region0: #{rmse_loss.1}
  #allocation0 [shape = 'u32[]', space=smem, size = 0x4, offset = 0x4, fixed_abs, tag = 'smem constant byte address 0x4 - core index']
  #allocation1 [shape = 'u32[144,128]{1,0:T(1,128)}', space=vmem, size = 0x12000, scoped, tag = 'internal scratch']
  %s0 = inlined_call_operand.vmem [shape: f32[16,128], index: 0, kind: input, shape index: {}]
  %s1 = inlined_call_operand.vmem [shape: f32[16,128], index: 1, kind: input, shape index: {}]
  %s2 = inlined_call_operand.vmem [shape: f32[8,128], index: 2, kind: output, shape index: {}]
  %s3 = sld [smem:[#allocation0]]
  $region22: #{rmse_loss.1} parent=0
    _
  %s5 = ssub.s32 1, %s3
  %s6 = scalar_select 0, %s5, %s3
  // Predicated region
  $region2: #{rmse_loss.1} parent=0 // pred_check
    _
  $region3: #{rmse_loss.1} parent=0 // pred_check_branch
    %8 = sbr.rel (0) target = $region5
  $region4: #{rmse_loss.1} parent=0 // pred_region
    _
  $region5: #{rmse_loss.1} parent=0 // pred_fallthru
    _
  // Predicated region
  $region6: #{rmse_loss.1} parent=0 // pred_check
    _
  $region7: #{rmse_loss.1} parent=0 // pred_check_branch
    %10 = sbr.rel (0) target = $region9
  $region8: #{rmse_loss.1} parent=0 // pred_region
    _
  $region9: #{rmse_loss.1} parent=0 // pred_fallthru
    _
  %p11 = scmp.eq.s32.totalorder 0, 0
  // Predicated region
  $region10: #{rmse_loss.1} parent=0 // pred_check
    %p12 = pneg %p11
  $region11: #{rmse_loss.1} parent=0 // pred_check_branch
    %14 = sbr.rel (%p12) target = $region13
  $region12: #{rmse_loss.1} parent=0 // pred_region
    %15 = vst [vmem:[%s2] sm:$0xff] 0.0
  $region13: #{rmse_loss.1} parent=0 // pred_fallthru
    _
  %v16 = vld [vmem:[%s0] sm:$0xff]
  %v17 = vld [vmem:[%s0 + $0x8] sm:$0xff]
  %v18 = vld [vmem:[%s1] sm:$0xff]
  %v19 = vld [vmem:[%s1 + $0x8] sm:$0xff]
  %v20 = vsub.f32 %v16, %v18
  %v21 = vsub.f32 %v17, %v19
  %v22 = vmul.f32 %v20, %v20
  %v23 = vmul.f32 %v21, %v21
  %v24 = vadd.f32 %v22, 1e-09
  %v25 = vadd.f32 %v23, 1e-09
  %v26 = vrsqrt.pop %v24
  %v27 = vmul.f32 %v24, %v26
  %vm28 = vcmp.eq.f32.partialorder %v24, inf
  %v29 = vsel %vm28, %v24, %v27
  %vm30 = vcmp.eq.f32.partialorder %v24, 0.0
  %v31 = vand.u32 %v24, 2147483648
  %v32 = vsel %vm30, %v31, %v29
  %v33 = vrsqrt.pop %v25
  %v34 = vmul.f32 %v25, %v33
  %vm35 = vcmp.eq.f32.partialorder %v25, inf
  %v36 = vsel %vm35, %v25, %v34
  %vm37 = vcmp.eq.f32.partialorder %v25, 0.0
  %v38 = vand.u32 %v25, 2147483648
  %v39 = vsel %vm37, %v38, %v36
  %v40 = vld [vmem:[%s2] sm:$0xff]
  %v41 = vadd.f32 %v32, %v39
  %v42 = vadd.f32 %v40, %v41
  %43 = vst [vmem:[%s2] sm:$0xff] %v42
  // Predicated region
  $region14: #{rmse_loss.1} parent=0 // pred_check
    _
  $region15: #{rmse_loss.1} parent=0 // pred_check_branch
    %45 = sbr.rel (0) target = $region17
  $region16: #{rmse_loss.1} parent=0 // pred_region
    _
  $region17: #{rmse_loss.1} parent=0 // pred_fallthru
    _
  // Predicated region
  $region18: #{rmse_loss.1} parent=0 // pred_check
    _
  $region19: #{rmse_loss.1} parent=0 // pred_check_branch
    %47 = sbr.rel (0) target = $region21
  $region20: #{rmse_loss.1} parent=0 // pred_region
    _
  $region21: #{rmse_loss.1} parent=0 // pred_fallthru
    _

</llo_original>
